<compile_context>
chip_gen: v6e
topology: v6e:2x2x1
jax: 0.10.0
libtpu: 0.0.40
codegen_flags: <defaults>
</compile_context>

<pallas_src>
import jax
import jax.numpy as jnp
from jax import lax
from jax.experimental import pallas as pl
from jax.experimental.pallas import tpu as pltpu


_PACK_LANES = 128  # lane-dense width of the per-tile partial-sum output block


def _round_up(x, m):
    return ((x + m - 1) // m) * m


def _make_cls_loss_kernel(num_chunks, num_class, batch, tile_b):
    K, C, B, TB = num_chunks, num_class, batch, tile_b

    def kernel(logits_ref, target_ref, out_ref):
        # logits_ref: (TB, K*C) input dtype (f32 or bf16); target_ref: (TB, 1) int32
        # out_ref:    (8, 128) f32 per-tile partials:
        #   row 0, lanes [0,K): sum over valid rows of per-row CE (lse - picked_logit)
        #   row 1, lanes [0,K): sum over valid rows of per-row residual row-sums
        tile = pl.program_id(0)

        # Row-validity mask (wrapper zero-pads B up to a multiple of TB).
        row_idx = tile * TB + lax.broadcasted_iota(jnp.int32, (TB, 1), 0)
        valid = (row_idx < B).astype(jnp.float32)                        # (TB, 1)

        # Hoisted target-dependent work: one-hot mask, reused for every chunk.
        tgt = target_ref[...]                                            # (TB, 1)
        cls_iota = lax.broadcasted_iota(jnp.int32, (TB, C), 1)
        onehot = (cls_iota == tgt).astype(jnp.float32)                   # (TB, C)

        acc = jnp.zeros((TB, C), jnp.float32)                            # boosted EMA accumulator
        ce_sums = []
        res_sums = []
        for k in range(K):                                               # static, unrolled
            # Per-chunk load + cast: only one chunk's f32 copy live at a time.
            logits = logits_ref[:, k * C:(k + 1) * C].astype(jnp.float32)    # (TB, C)

            # ---- Cross entropy per row (summed here; divided by B in the wrapper) ----
            m = jnp.max(logits, axis=-1, keepdims=True)
            lse = m + jnp.log(jnp.sum(jnp.exp(logits - m), axis=-1, keepdims=True))
            picked = jnp.sum(onehot * logits, axis=-1, keepdims=True)        # (TB, 1)
            ce_sums.append(jnp.sum((lse - picked) * valid,
                                   axis=0, keepdims=True))                   # (1, 1)

            # ---- Residual row-sum: sum_C(onehot - softmax(acc)) = 1 - sum_C softmax ----
            # softmax(acc) / the residual tile are never materialized; exact per-row
            # reciprocal (cheap, (TB,1)) instead of a full-tile divide + subtract.
            ma = jnp.max(acc, axis=-1, keepdims=True)
            ea = jnp.exp(acc - ma)
            inv_s = jnp.float32(1.0) / jnp.sum(ea, axis=-1, keepdims=True)    # (TB, 1)
            sm_rowsum = jnp.sum(ea * inv_s, axis=-1, keepdims=True)           # (TB, 1) ~ 1
            res_sums.append(jnp.sum((jnp.float32(1.0) - sm_rowsum) * valid,
                                    axis=0, keepdims=True))                   # (1, 1)

            # ---- Update boosted accumulator: eta = 2 / (k + 2) ----
            eta = jnp.float32(2.0 / (k + 2.0))
            acc = eta * logits + (jnp.float32(1.0) - eta) * acc

        # ---- Pack 2K partial scalars into one unmasked, lane-dense (8,128) store ----
        r_i = lax.broadcasted_iota(jnp.int32, (8, _PACK_LANES), 0)
        l_i = lax.broadcasted_iota(jnp.int32, (8, _PACK_LANES), 1)
        out_tile = jnp.zeros((8, _PACK_LANES), jnp.float32)
        for k in range(K):
            out_tile = out_tile + jnp.where((r_i == 0) & (l_i == k), ce_sums[k], 0.0)
            out_tile = out_tile + jnp.where((r_i == 1) & (l_i == k), res_sums[k], 0.0)
        out_ref[...] = out_tile

    return kernel


def classify_loss(inputs, target, num_chunks):
    """inputs: [B, K*C] logits (f32 or bf16); target: [B] int labels; K = num_chunks."""
    B, KC = inputs.shape
    assert KC % num_chunks == 0
    C = KC // num_chunks
    itemsize = jnp.dtype(inputs.dtype).itemsize

    # Batch-tile size: multiple of 8 sublanes; cap so the double-buffered input tile
    # (plus ~6x TB*C*4 B of f32 working set) stays well under v7x's 64 MiB VMEM.
    input_budget = 24 * 1024 * 1024                       # bytes for 2x pipelined input tile
    tb = max(8, min(512, (input_budget // (2 * KC * itemsize)) // 8 * 8))
    tb = min(tb, _round_up(B, 8))
    b_pad = _round_up(B, tb)
    num_tiles = b_pad // tb

    logits = inputs
    tgt = target.astype(jnp.int32).reshape(B, 1)
    if b_pad != B:
        logits = jnp.pad(logits, ((0, b_pad - B), (0, 0)))
        tgt = jnp.pad(tgt, ((0, b_pad - B), (0, 0)))

    parts = pl.pallas_call(
        _make_cls_loss_kernel(num_chunks, C, B, tb),
        out_shape=jax.ShapeDtypeStruct((num_tiles * 8, _PACK_LANES), jnp.float32),
        grid=(num_tiles,),
        in_specs=[
            pl.BlockSpec((tb, KC), lambda i: (i, 0)),      # logits tile (2-D, lane-dense)
            pl.BlockSpec((tb, 1), lambda i: (i, 0)),       # target tile
        ],
        out_specs=pl.BlockSpec((8, _PACK_LANES), lambda i: (i, 0)),
        compiler_params=pltpu.CompilerParams(
            dimension_semantics=("parallel",),             # per-tile outputs -> megacore-safe
            vmem_limit_bytes=48 * 1024 * 1024,
        ),
    )(logits, tgt)

    # Combine partial sums ONCE at the end: loss = sum_k mean(CE_k) * mean(residual_k).
    parts = parts.reshape(num_tiles, 8, _PACK_LANES)
    ce_mean = jnp.sum(parts[:, 0, :num_chunks], axis=0) / jnp.float32(B)        # (K,)
    res_mean = jnp.sum(parts[:, 1, :num_chunks], axis=0) / jnp.float32(B * C)   # (K,)
    return jnp.sum(ce_mean * res_mean)


def _reference_loss(inputs, target, num_chunks):
    """Pure-JAX reference mirroring the PyTorch forward."""
    B, KC = inputs.shape
    C = KC // num_chunks
    chunks = [inputs[:, i * C:(i + 1) * C].astype(jnp.float32) for i in range(num_chunks)]
    onehot = jax.nn.one_hot(target, C, dtype=jnp.float32)
    loss = jnp.float32(0.0)
    for idx in range(num_chunks):
        acc = jnp.zeros((B, C), jnp.float32)
        for i in range(idx):
            eta = 2.0 / (i + 2.0)
            acc = eta * chunks[i] + (1.0 - eta) * acc
        residual = onehot - jax.nn.softmax(acc, axis=1)
        logp = jax.nn.log_softmax(chunks[idx], axis=1)
        ce = -jnp.mean(jnp.sum(onehot * logp, axis=1))
        loss = loss + jnp.mean(ce * residual)
    return loss


if __name__ == "__main__":
    key = jax.random.PRNGKey(0)
    B = 8               # batch
    num_class = 16      # C
    K = 4               # len(embed_dim): number of boosted heads / chunks

    k_in, k_tgt = jax.random.split(key)
    inputs = jax.random.normal(k_in, (B, K * num_class), dtype=jnp.float32)
    target = jax.random.randint(k_tgt, (B,), 0, num_class, dtype=jnp.int32)

    loss = classify_loss(inputs, target, K)
    loss = jax.block_until_ready(loss)

    ref = _reference_loss(inputs, target, K)
    assert jnp.isfinite(loss), "non-finite loss"
    assert abs(float(loss) - float(ref)) < 1e-4, (float(loss), float(ref))

    print("KERNEL_OK")
</pallas_src>

<mosaic_0001>
module attributes {stable_mosaic.version = 11 : i64} {
  func.func @kernel(%arg0: i32, %arg1: memref<8x64xf32, #tpu.memory_space<vmem>>, %arg2: memref<8x1xi32, #tpu.memory_space<vmem>>, %arg3: memref<8x128xf32, #tpu.memory_space<vmem>>) attributes {dimension_semantics = [#tpu.dimension_semantics<parallel>], iteration_bounds = array<i64: 1>, scalar_prefetch = 0 : i64, scratch_operands = 0 : i64, tpu.core_type = #tpu.core_type<tc>, window_params = [{transform_indices = @transform_0, window_bounds = array<i64: 8, 64>}, {transform_indices = @transform_1, window_bounds = array<i64: 8, 1>}, {transform_indices = @transform_2, window_bounds = array<i64: 8, 128>}]} {
    %c8_i32 = arith.constant 8 : i32
    %0 = arith.muli %arg0, %c8_i32 : i32
    %1 = tpu.iota {dimensions = array<i32: 0>} : vector<8x1xi32>
    %2 = vector.broadcast %0 : i32 to vector<8x1xi32>
    %3 = arith.addi %2, %1 : vector<8x1xi32>
    %c8_i32_0 = arith.constant 8 : i32
    %4 = vector.broadcast %c8_i32_0 : i32 to vector<8x1xi32>
    %5 = arith.cmpi slt, %3, %4 : vector<8x1xi32>
    %6 = arith.extui %5 : vector<8x1xi1> to vector<8x1xi32>
    %7 = arith.sitofp %6 : vector<8x1xi32> to vector<8x1xf32>
    %c0 = arith.constant 0 : index
    %c0_1 = arith.constant 0 : index
    %8 = vector.load %arg2[%c0, %c0_1] : memref<8x1xi32, #tpu.memory_space<vmem>>, vector<8x1xi32>
    %9 = tpu.iota {dimensions = array<i32: 1>} : vector<8x16xi32>
    %10 = vector.broadcast %8 : vector<8x1xi32> to vector<8x16xi32>
    %11 = arith.cmpi eq, %9, %10 : vector<8x16xi32>
    %12 = arith.extui %11 : vector<8x16xi1> to vector<8x16xi32>
    %13 = arith.sitofp %12 : vector<8x16xi32> to vector<8x16xf32>
    %cst = arith.constant 0.000000e+00 : f32
    %14 = vector.broadcast %cst : f32 to vector<8x16xf32>
    %c0_2 = arith.constant 0 : index
    %c0_3 = arith.constant 0 : index
    %15 = vector.load %arg1[%c0_2, %c0_3] : memref<8x64xf32, #tpu.memory_space<vmem>>, vector<8x16xf32>
    %cst_4 = arith.constant dense<0xFF800000> : vector<8xf32>
    %16 = vector.multi_reduction <maximumf>, %15, %cst_4 [1] : vector<8x16xf32> to vector<8xf32>
    %17 = vector.shape_cast %16 : vector<8xf32> to vector<8x1xf32>
    %18 = vector.broadcast %17 : vector<8x1xf32> to vector<8x16xf32>
    %19 = arith.subf %15, %18 : vector<8x16xf32>
    %20 = math.exp %19 : vector<8x16xf32>
    %cst_5 = arith.constant dense<0.000000e+00> : vector<8xf32>
    %21 = vector.multi_reduction <add>, %20, %cst_5 [1] : vector<8x16xf32> to vector<8xf32>
    %22 = vector.shape_cast %21 : vector<8xf32> to vector<8x1xf32>
    %23 = math.log %22 : vector<8x1xf32>
    %24 = arith.addf %17, %23 : vector<8x1xf32>
    %25 = arith.mulf %13, %15 : vector<8x16xf32>
    %cst_6 = arith.constant dense<0.000000e+00> : vector<8xf32>
    %26 = vector.multi_reduction <add>, %25, %cst_6 [1] : vector<8x16xf32> to vector<8xf32>
    %27 = vector.shape_cast %26 : vector<8xf32> to vector<8x1xf32>
    %28 = arith.subf %24, %27 : vector<8x1xf32>
    %29 = arith.mulf %28, %7 : vector<8x1xf32>
    %cst_7 = arith.constant dense<0.000000e+00> : vector<1xf32>
    %30 = vector.multi_reduction <add>, %29, %cst_7 [0] : vector<8x1xf32> to vector<1xf32>
    %31 = vector.shape_cast %30 : vector<1xf32> to vector<1x1xf32>
    %cst_8 = arith.constant dense<0xFF800000> : vector<8xf32>
    %32 = vector.multi_reduction <maximumf>, %14, %cst_8 [1] : vector<8x16xf32> to vector<8xf32>
    %33 = vector.shape_cast %32 : vector<8xf32> to vector<8x1xf32>
    %34 = vector.broadcast %33 : vector<8x1xf32> to vector<8x16xf32>
    %35 = arith.subf %14, %34 : vector<8x16xf32>
    %36 = math.exp %35 : vector<8x16xf32>
    %cst_9 = arith.constant dense<0.000000e+00> : vector<8xf32>
    %37 = vector.multi_reduction <add>, %36, %cst_9 [1] : vector<8x16xf32> to vector<8xf32>
    %38 = vector.shape_cast %37 : vector<8xf32> to vector<8x1xf32>
    %cst_10 = arith.constant 1.000000e+00 : f32
    %39 = vector.broadcast %cst_10 : f32 to vector<8x1xf32>
    %40 = arith.divf %39, %38 : vector<8x1xf32>
    %41 = vector.broadcast %40 : vector<8x1xf32> to vector<8x16xf32>
    %42 = arith.mulf %36, %41 : vector<8x16xf32>
    %cst_11 = arith.constant dense<0.000000e+00> : vector<8xf32>
    %43 = vector.multi_reduction <add>, %42, %cst_11 [1] : vector<8x16xf32> to vector<8xf32>
    %44 = vector.shape_cast %43 : vector<8xf32> to vector<8x1xf32>
    %cst_12 = arith.constant 1.000000e+00 : f32
    %45 = vector.broadcast %cst_12 : f32 to vector<8x1xf32>
    %46 = arith.subf %45, %44 : vector<8x1xf32>
    %47 = arith.mulf %46, %7 : vector<8x1xf32>
    %cst_13 = arith.constant dense<0.000000e+00> : vector<1xf32>
    %48 = vector.multi_reduction <add>, %47, %cst_13 [0] : vector<8x1xf32> to vector<1xf32>
    %49 = vector.shape_cast %48 : vector<1xf32> to vector<1x1xf32>
    %cst_14 = arith.constant 1.000000e+00 : f32
    %50 = vector.broadcast %cst_14 : f32 to vector<8x16xf32>
    %51 = arith.mulf %50, %15 : vector<8x16xf32>
    %cst_15 = arith.constant 1.000000e+00 : f32
    %cst_16 = arith.constant 1.000000e+00 : f32
    %52 = arith.subf %cst_15, %cst_16 : f32
    %53 = vector.broadcast %52 : f32 to vector<8x16xf32>
    %54 = arith.mulf %53, %14 : vector<8x16xf32>
    %55 = arith.addf %51, %54 : vector<8x16xf32>
    %c0_17 = arith.constant 0 : index
    %c16 = arith.constant 16 : index
    %56 = vector.load %arg1[%c0_17, %c16] : memref<8x64xf32, #tpu.memory_space<vmem>>, vector<8x16xf32>
    %cst_18 = arith.constant dense<0xFF800000> : vector<8xf32>
    %57 = vector.multi_reduction <maximumf>, %56, %cst_18 [1] : vector<8x16xf32> to vector<8xf32>
    %58 = vector.shape_cast %57 : vector<8xf32> to vector<8x1xf32>
    %59 = vector.broadcast %58 : vector<8x1xf32> to vector<8x16xf32>
    %60 = arith.subf %56, %59 : vector<8x16xf32>
    %61 = math.exp %60 : vector<8x16xf32>
    %cst_19 = arith.constant dense<0.000000e+00> : vector<8xf32>
    %62 = vector.multi_reduction <add>, %61, %cst_19 [1] : vector<8x16xf32> to vector<8xf32>
    %63 = vector.shape_cast %62 : vector<8xf32> to vector<8x1xf32>
    %64 = math.log %63 : vector<8x1xf32>
    %65 = arith.addf %58, %64 : vector<8x1xf32>
    %66 = arith.mulf %13, %56 : vector<8x16xf32>
    %cst_20 = arith.constant dense<0.000000e+00> : vector<8xf32>
    %67 = vector.multi_reduction <add>, %66, %cst_20 [1] : vector<8x16xf32> to vector<8xf32>
    %68 = vector.shape_cast %67 : vector<8xf32> to vector<8x1xf32>
    %69 = arith.subf %65, %68 : vector<8x1xf32>
    %70 = arith.mulf %69, %7 : vector<8x1xf32>
    %cst_21 = arith.constant dense<0.000000e+00> : vector<1xf32>
    %71 = vector.multi_reduction <add>, %70, %cst_21 [0] : vector<8x1xf32> to vector<1xf32>
    %72 = vector.shape_cast %71 : vector<1xf32> to vector<1x1xf32>
    %cst_22 = arith.constant dense<0xFF800000> : vector<8xf32>
    %73 = vector.multi_reduction <maximumf>, %55, %cst_22 [1] : vector<8x16xf32> to vector<8xf32>
    %74 = vector.shape_cast %73 : vector<8xf32> to vector<8x1xf32>
    %75 = vector.broadcast %74 : vector<8x1xf32> to vector<8x16xf32>
    %76 = arith.subf %55, %75 : vector<8x16xf32>
    %77 = math.exp %76 : vector<8x16xf32>
    %cst_23 = arith.constant dense<0.000000e+00> : vector<8xf32>
    %78 = vector.multi_reduction <add>, %77, %cst_23 [1] : vector<8x16xf32> to vector<8xf32>
    %79 = vector.shape_cast %78 : vector<8xf32> to vector<8x1xf32>
    %cst_24 = arith.constant 1.000000e+00 : f32
    %80 = vector.broadcast %cst_24 : f32 to vector<8x1xf32>
    %81 = arith.divf %80, %79 : vector<8x1xf32>
    %82 = vector.broadcast %81 : vector<8x1xf32> to vector<8x16xf32>
    %83 = arith.mulf %77, %82 : vector<8x16xf32>
    %cst_25 = arith.constant dense<0.000000e+00> : vector<8xf32>
    %84 = vector.multi_reduction <add>, %83, %cst_25 [1] : vector<8x16xf32> to vector<8xf32>
    %85 = vector.shape_cast %84 : vector<8xf32> to vector<8x1xf32>
    %cst_26 = arith.constant 1.000000e+00 : f32
    %86 = vector.broadcast %cst_26 : f32 to vector<8x1xf32>
    %87 = arith.subf %86, %85 : vector<8x1xf32>
    %88 = arith.mulf %87, %7 : vector<8x1xf32>
    %cst_27 = arith.constant dense<0.000000e+00> : vector<1xf32>
    %89 = vector.multi_reduction <add>, %88, %cst_27 [0] : vector<8x1xf32> to vector<1xf32>
    %90 = vector.shape_cast %89 : vector<1xf32> to vector<1x1xf32>
    %cst_28 = arith.constant 0.666666686 : f32
    %91 = vector.broadcast %cst_28 : f32 to vector<8x16xf32>
    %92 = arith.mulf %91, %56 : vector<8x16xf32>
    %cst_29 = arith.constant 1.000000e+00 : f32
    %cst_30 = arith.constant 0.666666686 : f32
    %93 = arith.subf %cst_29, %cst_30 : f32
    %94 = vector.broadcast %93 : f32 to vector<8x16xf32>
    %95 = arith.mulf %94, %55 : vector<8x16xf32>
    %96 = arith.addf %92, %95 : vector<8x16xf32>
    %c0_31 = arith.constant 0 : index
    %c32 = arith.constant 32 : index
    %97 = vector.load %arg1[%c0_31, %c32] : memref<8x64xf32, #tpu.memory_space<vmem>>, vector<8x16xf32>
    %cst_32 = arith.constant dense<0xFF800000> : vector<8xf32>
    %98 = vector.multi_reduction <maximumf>, %97, %cst_32 [1] : vector<8x16xf32> to vector<8xf32>
    %99 = vector.shape_cast %98 : vector<8xf32> to vector<8x1xf32>
    %100 = vector.broadcast %99 : vector<8x1xf32> to vector<8x16xf32>
    %101 = arith.subf %97, %100 : vector<8x16xf32>
    %102 = math.exp %101 : vector<8x16xf32>
    %cst_33 = arith.constant dense<0.000000e+00> : vector<8xf32>
    %103 = vector.multi_reduction <add>, %102, %cst_33 [1] : vector<8x16xf32> to vector<8xf32>
    %104 = vector.shape_cast %103 : vector<8xf32> to vector<8x1xf32>
    %105 = math.log %104 : vector<8x1xf32>
    %106 = arith.addf %99, %105 : vector<8x1xf32>
    %107 = arith.mulf %13, %97 : vector<8x16xf32>
    %cst_34 = arith.constant dense<0.000000e+00> : vector<8xf32>
    %108 = vector.multi_reduction <add>, %107, %cst_34 [1] : vector<8x16xf32> to vector<8xf32>
    %109 = vector.shape_cast %108 : vector<8xf32> to vector<8x1xf32>
    %110 = arith.subf %106, %109 : vector<8x1xf32>
    %111 = arith.mulf %110, %7 : vector<8x1xf32>
    %cst_35 = arith.constant dense<0.000000e+00> : vector<1xf32>
    %112 = vector.multi_reduction <add>, %111, %cst_35 [0] : vector<8x1xf32> to vector<1xf32>
    %113 = vector.shape_cast %112 : vector<1xf32> to vector<1x1xf32>
    %cst_36 = arith.constant dense<0xFF800000> : vector<8xf32>
    %114 = vector.multi_reduction <maximumf>, %96, %cst_36 [1] : vector<8x16xf32> to vector<8xf32>
    %115 = vector.shape_cast %114 : vector<8xf32> to vector<8x1xf32>
    %116 = vector.broadcast %115 : vector<8x1xf32> to vector<8x16xf32>
    %117 = arith.subf %96, %116 : vector<8x16xf32>
    %118 = math.exp %117 : vector<8x16xf32>
    %cst_37 = arith.constant dense<0.000000e+00> : vector<8xf32>
    %119 = vector.multi_reduction <add>, %118, %cst_37 [1] : vector<8x16xf32> to vector<8xf32>
    %120 = vector.shape_cast %119 : vector<8xf32> to vector<8x1xf32>
    %cst_38 = arith.constant 1.000000e+00 : f32
    %121 = vector.broadcast %cst_38 : f32 to vector<8x1xf32>
    %122 = arith.divf %121, %120 : vector<8x1xf32>
    %123 = vector.broadcast %122 : vector<8x1xf32> to vector<8x16xf32>
    %124 = arith.mulf %118, %123 : vector<8x16xf32>
    %cst_39 = arith.constant dense<0.000000e+00> : vector<8xf32>
    %125 = vector.multi_reduction <add>, %124, %cst_39 [1] : vector<8x16xf32> to vector<8xf32>
    %126 = vector.shape_cast %125 : vector<8xf32> to vector<8x1xf32>
    %cst_40 = arith.constant 1.000000e+00 : f32
    %127 = vector.broadcast %cst_40 : f32 to vector<8x1xf32>
    %128 = arith.subf %127, %126 : vector<8x1xf32>
    %129 = arith.mulf %128, %7 : vector<8x1xf32>
    %cst_41 = arith.constant dense<0.000000e+00> : vector<1xf32>
    %130 = vector.multi_reduction <add>, %129, %cst_41 [0] : vector<8x1xf32> to vector<1xf32>
    %131 = vector.shape_cast %130 : vector<1xf32> to vector<1x1xf32>
    %cst_42 = arith.constant 5.000000e-01 : f32
    %132 = vector.broadcast %cst_42 : f32 to vector<8x16xf32>
    %133 = arith.mulf %132, %97 : vector<8x16xf32>
    %cst_43 = arith.constant 1.000000e+00 : f32
    %cst_44 = arith.constant 5.000000e-01 : f32
    %134 = arith.subf %cst_43, %cst_44 : f32
    %135 = vector.broadcast %134 : f32 to vector<8x16xf32>
    %136 = arith.mulf %135, %96 : vector<8x16xf32>
    %137 = arith.addf %133, %136 : vector<8x16xf32>
    %c0_45 = arith.constant 0 : index
    %c48 = arith.constant 48 : index
    %138 = vector.load %arg1[%c0_45, %c48] : memref<8x64xf32, #tpu.memory_space<vmem>>, vector<8x16xf32>
    %cst_46 = arith.constant dense<0xFF800000> : vector<8xf32>
    %139 = vector.multi_reduction <maximumf>, %138, %cst_46 [1] : vector<8x16xf32> to vector<8xf32>
    %140 = vector.shape_cast %139 : vector<8xf32> to vector<8x1xf32>
    %141 = vector.broadcast %140 : vector<8x1xf32> to vector<8x16xf32>
    %142 = arith.subf %138, %141 : vector<8x16xf32>
    %143 = math.exp %142 : vector<8x16xf32>
    %cst_47 = arith.constant dense<0.000000e+00> : vector<8xf32>
    %144 = vector.multi_reduction <add>, %143, %cst_47 [1] : vector<8x16xf32> to vector<8xf32>
    %145 = vector.shape_cast %144 : vector<8xf32> to vector<8x1xf32>
    %146 = math.log %145 : vector<8x1xf32>
    %147 = arith.addf %140, %146 : vector<8x1xf32>
    %148 = arith.mulf %13, %138 : vector<8x16xf32>
    %cst_48 = arith.constant dense<0.000000e+00> : vector<8xf32>
    %149 = vector.multi_reduction <add>, %148, %cst_48 [1] : vector<8x16xf32> to vector<8xf32>
    %150 = vector.shape_cast %149 : vector<8xf32> to vector<8x1xf32>
    %151 = arith.subf %147, %150 : vector<8x1xf32>
    %152 = arith.mulf %151, %7 : vector<8x1xf32>
    %cst_49 = arith.constant dense<0.000000e+00> : vector<1xf32>
    %153 = vector.multi_reduction <add>, %152, %cst_49 [0] : vector<8x1xf32> to vector<1xf32>
    %154 = vector.shape_cast %153 : vector<1xf32> to vector<1x1xf32>
    %cst_50 = arith.constant dense<0xFF800000> : vector<8xf32>
    %155 = vector.multi_reduction <maximumf>, %137, %cst_50 [1] : vector<8x16xf32> to vector<8xf32>
    %156 = vector.shape_cast %155 : vector<8xf32> to vector<8x1xf32>
    %157 = vector.broadcast %156 : vector<8x1xf32> to vector<8x16xf32>
    %158 = arith.subf %137, %157 : vector<8x16xf32>
    %159 = math.exp %158 : vector<8x16xf32>
    %cst_51 = arith.constant dense<0.000000e+00> : vector<8xf32>
    %160 = vector.multi_reduction <add>, %159, %cst_51 [1] : vector<8x16xf32> to vector<8xf32>
    %161 = vector.shape_cast %160 : vector<8xf32> to vector<8x1xf32>
    %cst_52 = arith.constant 1.000000e+00 : f32
    %162 = vector.broadcast %cst_52 : f32 to vector<8x1xf32>
    %163 = arith.divf %162, %161 : vector<8x1xf32>
    %164 = vector.broadcast %163 : vector<8x1xf32> to vector<8x16xf32>
    %165 = arith.mulf %159, %164 : vector<8x16xf32>
    %cst_53 = arith.constant dense<0.000000e+00> : vector<8xf32>
    %166 = vector.multi_reduction <add>, %165, %cst_53 [1] : vector<8x16xf32> to vector<8xf32>
    %167 = vector.shape_cast %166 : vector<8xf32> to vector<8x1xf32>
    %cst_54 = arith.constant 1.000000e+00 : f32
    %168 = vector.broadcast %cst_54 : f32 to vector<8x1xf32>
    %169 = arith.subf %168, %167 : vector<8x1xf32>
    %170 = arith.mulf %169, %7 : vector<8x1xf32>
    %cst_55 = arith.constant dense<0.000000e+00> : vector<1xf32>
    %171 = vector.multi_reduction <add>, %170, %cst_55 [0] : vector<8x1xf32> to vector<1xf32>
    %172 = vector.shape_cast %171 : vector<1xf32> to vector<1x1xf32>
    %173 = tpu.iota {dimensions = array<i32: 0>} : vector<8x128xi32>
    %174 = tpu.iota {dimensions = array<i32: 1>} : vector<8x128xi32>
    %cst_56 = arith.constant 0.000000e+00 : f32
    %175 = vector.broadcast %cst_56 : f32 to vector<8x128xf32>
    %c0_i32 = arith.constant 0 : i32
    %176 = vector.broadcast %c0_i32 : i32 to vector<8x128xi32>
    %177 = arith.cmpi eq, %173, %176 : vector<8x128xi32>
    %c0_i32_57 = arith.constant 0 : i32
    %178 = vector.broadcast %c0_i32_57 : i32 to vector<8x128xi32>
    %179 = arith.cmpi eq, %174, %178 : vector<8x128xi32>
    %180 = arith.andi %177, %179 : vector<8x128xi1>
    %cst_58 = arith.constant 0.000000e+00 : f32
    %181 = vector.shape_cast %31 : vector<1x1xf32> to vector<1x1xf32>
    %182 = vector.broadcast %181 : vector<1x1xf32> to vector<8x128xf32>
    %183 = vector.broadcast %cst_58 : f32 to vector<8x128xf32>
    %184 = arith.select %180, %182, %183 : vector<8x128xi1>, vector<8x128xf32>
    %185 = arith.addf %175, %184 : vector<8x128xf32>
    %c1_i32 = arith.constant 1 : i32
    %186 = vector.broadcast %c1_i32 : i32 to vector<8x128xi32>
    %187 = arith.cmpi eq, %173, %186 : vector<8x128xi32>
    %c0_i32_59 = arith.constant 0 : i32
    %188 = vector.broadcast %c0_i32_59 : i32 to vector<8x128xi32>
    %189 = arith.cmpi eq, %174, %188 : vector<8x128xi32>
    %190 = arith.andi %187, %189 : vector<8x128xi1>
    %cst_60 = arith.constant 0.000000e+00 : f32
    %191 = vector.shape_cast %49 : vector<1x1xf32> to vector<1x1xf32>
    %192 = vector.broadcast %191 : vector<1x1xf32> to vector<8x128xf32>
    %193 = vector.broadcast %cst_60 : f32 to vector<8x128xf32>
    %194 = arith.select %190, %192, %193 : vector<8x128xi1>, vector<8x128xf32>
    %195 = arith.addf %185, %194 : vector<8x128xf32>
    %c0_i32_61 = arith.constant 0 : i32
    %196 = vector.broadcast %c0_i32_61 : i32 to vector<8x128xi32>
    %197 = arith.cmpi eq, %173, %196 : vector<8x128xi32>
    %c1_i32_62 = arith.constant 1 : i32
    %198 = vector.broadcast %c1_i32_62 : i32 to vector<8x128xi32>
    %199 = arith.cmpi eq, %174, %198 : vector<8x128xi32>
    %200 = arith.andi %197, %199 : vector<8x128xi1>
    %cst_63 = arith.constant 0.000000e+00 : f32
    %201 = vector.shape_cast %72 : vector<1x1xf32> to vector<1x1xf32>
    %202 = vector.broadcast %201 : vector<1x1xf32> to vector<8x128xf32>
    %203 = vector.broadcast %cst_63 : f32 to vector<8x128xf32>
    %204 = arith.select %200, %202, %203 : vector<8x128xi1>, vector<8x128xf32>
    %205 = arith.addf %195, %204 : vector<8x128xf32>
    %c1_i32_64 = arith.constant 1 : i32
    %206 = vector.broadcast %c1_i32_64 : i32 to vector<8x128xi32>
    %207 = arith.cmpi eq, %173, %206 : vector<8x128xi32>
    %c1_i32_65 = arith.constant 1 : i32
    %208 = vector.broadcast %c1_i32_65 : i32 to vector<8x128xi32>
    %209 = arith.cmpi eq, %174, %208 : vector<8x128xi32>
    %210 = arith.andi %207, %209 : vector<8x128xi1>
    %cst_66 = arith.constant 0.000000e+00 : f32
    %211 = vector.shape_cast %90 : vector<1x1xf32> to vector<1x1xf32>
    %212 = vector.broadcast %211 : vector<1x1xf32> to vector<8x128xf32>
    %213 = vector.broadcast %cst_66 : f32 to vector<8x128xf32>
    %214 = arith.select %210, %212, %213 : vector<8x128xi1>, vector<8x128xf32>
    %215 = arith.addf %205, %214 : vector<8x128xf32>
    %c0_i32_67 = arith.constant 0 : i32
    %216 = vector.broadcast %c0_i32_67 : i32 to vector<8x128xi32>
    %217 = arith.cmpi eq, %173, %216 : vector<8x128xi32>
    %c2_i32 = arith.constant 2 : i32
    %218 = vector.broadcast %c2_i32 : i32 to vector<8x128xi32>
    %219 = arith.cmpi eq, %174, %218 : vector<8x128xi32>
    %220 = arith.andi %217, %219 : vector<8x128xi1>
    %cst_68 = arith.constant 0.000000e+00 : f32
    %221 = vector.shape_cast %113 : vector<1x1xf32> to vector<1x1xf32>
    %222 = vector.broadcast %221 : vector<1x1xf32> to vector<8x128xf32>
    %223 = vector.broadcast %cst_68 : f32 to vector<8x128xf32>
    %224 = arith.select %220, %222, %223 : vector<8x128xi1>, vector<8x128xf32>
    %225 = arith.addf %215, %224 : vector<8x128xf32>
    %c1_i32_69 = arith.constant 1 : i32
    %226 = vector.broadcast %c1_i32_69 : i32 to vector<8x128xi32>
    %227 = arith.cmpi eq, %173, %226 : vector<8x128xi32>
    %c2_i32_70 = arith.constant 2 : i32
    %228 = vector.broadcast %c2_i32_70 : i32 to vector<8x128xi32>
    %229 = arith.cmpi eq, %174, %228 : vector<8x128xi32>
    %230 = arith.andi %227, %229 : vector<8x128xi1>
    %cst_71 = arith.constant 0.000000e+00 : f32
    %231 = vector.shape_cast %131 : vector<1x1xf32> to vector<1x1xf32>
    %232 = vector.broadcast %231 : vector<1x1xf32> to vector<8x128xf32>
    %233 = vector.broadcast %cst_71 : f32 to vector<8x128xf32>
    %234 = arith.select %230, %232, %233 : vector<8x128xi1>, vector<8x128xf32>
    %235 = arith.addf %225, %234 : vector<8x128xf32>
    %c0_i32_72 = arith.constant 0 : i32
    %236 = vector.broadcast %c0_i32_72 : i32 to vector<8x128xi32>
    %237 = arith.cmpi eq, %173, %236 : vector<8x128xi32>
    %c3_i32 = arith.constant 3 : i32
    %238 = vector.broadcast %c3_i32 : i32 to vector<8x128xi32>
    %239 = arith.cmpi eq, %174, %238 : vector<8x128xi32>
    %240 = arith.andi %237, %239 : vector<8x128xi1>
    %cst_73 = arith.constant 0.000000e+00 : f32
    %241 = vector.shape_cast %154 : vector<1x1xf32> to vector<1x1xf32>
    %242 = vector.broadcast %241 : vector<1x1xf32> to vector<8x128xf32>
    %243 = vector.broadcast %cst_73 : f32 to vector<8x128xf32>
    %244 = arith.select %240, %242, %243 : vector<8x128xi1>, vector<8x128xf32>
    %245 = arith.addf %235, %244 : vector<8x128xf32>
    %c1_i32_74 = arith.constant 1 : i32
    %246 = vector.broadcast %c1_i32_74 : i32 to vector<8x128xi32>
    %247 = arith.cmpi eq, %173, %246 : vector<8x128xi32>
    %c3_i32_75 = arith.constant 3 : i32
    %248 = vector.broadcast %c3_i32_75 : i32 to vector<8x128xi32>
    %249 = arith.cmpi eq, %174, %248 : vector<8x128xi32>
    %250 = arith.andi %247, %249 : vector<8x128xi1>
    %cst_76 = arith.constant 0.000000e+00 : f32
    %251 = vector.shape_cast %172 : vector<1x1xf32> to vector<1x1xf32>
    %252 = vector.broadcast %251 : vector<1x1xf32> to vector<8x128xf32>
    %253 = vector.broadcast %cst_76 : f32 to vector<8x128xf32>
    %254 = arith.select %250, %252, %253 : vector<8x128xi1>, vector<8x128xf32>
    %255 = arith.addf %245, %254 : vector<8x128xf32>
    %c0_77 = arith.constant 0 : index
    %c0_78 = arith.constant 0 : index
    %256 = vector.load %arg3[%c0_77, %c0_78] : memref<8x128xf32, #tpu.memory_space<vmem>>, vector<8x128xf32>
    tpu.vector_store %arg3[%c0_77, %c0_78], %255 {strides = array<i32>} : memref<8x128xf32, #tpu.memory_space<vmem>>, vector<8x128xf32>,
    return
  }
  func.func @transform_0(%arg0: i32) -> (i32, i32) {
    %c0_i32 = arith.constant 0 : i32
    %c0_i32_0 = arith.constant 0 : i32
    return %arg0, %c0_i32 : i32, i32
  }
  func.func @transform_1(%arg0: i32) -> (i32, i32) {
    %c0_i32 = arith.constant 0 : i32
    %c0_i32_0 = arith.constant 0 : i32
    return %arg0, %c0_i32 : i32, i32
  }
  func.func @transform_2(%arg0: i32) -> (i32, i32) {
    %c0_i32 = arith.constant 0 : i32
    %c0_i32_0 = arith.constant 0 : i32
    return %arg0, %c0_i32 : i32, i32
  }
}

</mosaic_0001>

<llo_original>
// kernel: tpu_custom_call.1
$region0: #{tpu_custom_call.1}
  #allocation0 [shape = 'u32[]', space=smem, size = 0x4, offset = 0x4, fixed_abs, tag = 'smem constant byte address 0x4 - core index']
  #allocation1 [shape = 'u32[144,128]{1,0:T(1,128)}', space=vmem, size = 0x12000, scoped, tag = 'internal scratch']
  %s0 = inlined_call_operand.vmem [shape: f32[8,64], index: 0, kind: input, shape index: {}]
  %s1 = inlined_call_operand.vmem [shape: s32[8,1], index: 1, kind: input, shape index: {}]
  %s2 = inlined_call_operand.hbm [shape: f32[8,128], index: 2, kind: output, shape index: {}]
  %s3 = sld [smem:[#allocation0]]
  $region18: #{tpu_custom_call.1} parent=0
    _
  %s5 = ssub.s32 1, %s3
  %s6 = scalar_select 0, %s5, %s3
  $region1: #{tpu_custom_call.1} parent=0
    #allocation2 [shape = 'u8[4096]{0}', space=vmem, size = 0x1000, scoped, tag = 'output window, operand 0, single buffered']
    #allocation3 [shape = 's32[1]{0}', space=sflag, size = 0x4, scoped, tag = 'scoped memory for tpu_custom_call.1']
    %7 = vsyncpa [#allocation3], 0
    // Predicated region
    $region2: #{tpu_custom_call.1} parent=1 // pred_check
      _
    $region3: #{tpu_custom_call.1} parent=1 // pred_check_branch
      %9 = sbr.rel (0) target = $region5
    $region4: #{tpu_custom_call.1} parent=1 // pred_region
      _
    $region5: #{tpu_custom_call.1} parent=1 // pred_fallthru
      _
    // Predicated region
    $region6: #{tpu_custom_call.1} parent=1 // pred_check
      _
    $region7: #{tpu_custom_call.1} parent=1 // pred_check_branch
      %11 = sbr.rel (0) target = $region9
    $region8: #{tpu_custom_call.1} parent=1 // pred_region
      _
    $region9: #{tpu_custom_call.1} parent=1 // pred_fallthru
      _
    %s12 = smul.u32 0, 8
    %v13 = vlaneseq
    %v14 = vshrl.u32 %v13, 7
    %v15 = vstv %s12
    %v16 = vadd.s32 %v15, %v14
    %vm17 = vcmp.lt.s32.totalorder %v16, 8
    %v18 = vsel %vm17, 1, 0
    %v19 = vcvt.s32.f32 %v18
    %v20 = vld [vmem:[%s1] sm:$0xff]
    %v21 = vlaneseq
    %v22 = vand.u32 %v21, 127
    %23 = vset.pattern.permute.xlu0 0
    %24 = vperm.xlu0 %23, %v20
    %v25 = vpop.permute.xlu0 %24
    %vm26 = vcmp.eq.s32.totalorder %v22, %v25
    %v27 = vsel %vm26, 1, 0
    %v28 = vcvt.s32.f32 %v27
    %v29 = vld [vmem:[%s0] sm:$0xff]
    %vm30 = vcmask 130048
    %v31 = vsel %vm30, %v29, -inf
    %32 = vmax.xlane.f32.xlu0 %v31
    %v33 = vpop.xlane.xlu0 %32
    %v34 = vsub.f32 %v29, %v33
    %v35 = vmul.f32 %v34, 1.442695
    %v36 = vpow.pop %v35
    %v37 = vsel %vm30, %v36, 0.0
    %38 = vadd.xlane.f32.xlu0 %v37
    %v39 = vpop.xlane.xlu0 %38
    %v40 = vlog2.pop %v39
    %v41 = vmul.f32 %v40, 0.6931472
    %v42 = vadd.f32 %v33, %v41
    %v43 = vmul.f32 %v28, %v29
    %v44 = vsel %vm30, %v43, 0.0
    %45 = vadd.xlane.f32.xlu0 %v44
    %v46 = vpop.xlane.xlu0 %45
    %v47 = vsub.f32 %v42, %v46
    %v48 = vmul.f32 %v47, %v19
    %v49 = vrot.slane %v48, 4
    %v50 = vadd.f32 %v48, %v49
    %v51 = vrot.slane %v50, 2
    %v52 = vadd.f32 %v50, %v51
    %v53 = vrot.slane %v52, 1
    %v54 = vadd.f32 %v52, %v53
    %v55 = vsel %vm30, 1.0, 0.0
    %56 = vadd.xlane.f32.xlu0 %v55
    %v57 = vpop.xlane.xlu0 %56
    %v58 = vrcp.pop %v57
    %v59 = vmul.f32 1.0, %v58
    %v60 = vsel %vm30, %v59, 0.0
    %61 = vadd.xlane.f32.xlu0 %v60
    %v62 = vpop.xlane.xlu0 %61
    %v63 = vsub.f32 1.0, %v62
    %v64 = vmul.f32 %v63, %v19
    %v65 = vrot.slane %v64, 4
    %v66 = vadd.f32 %v64, %v65
    %v67 = vrot.slane %v66, 2
    %v68 = vadd.f32 %v66, %v67
    %v69 = vrot.slane %v68, 1
    %v70 = vadd.f32 %v68, %v69
    %v71 = vadd.f32 %v29, 0.0
    %vm72 = vcmask 261248
    %v73 = vsel %vm72, %v29, -inf
    %74 = vmax.xlane.f32.xlu0 %v73
    %v75 = vpop.xlane.xlu0 %74
    %v76 = vsub.f32 %v29, %v75
    %v77 = vmul.f32 %v76, 1.442695
    %v78 = vpow.pop %v77
    %80 = vrot.lane.b32.xlu0 %v78, 112
    %v81 = vpop.permute.xlu0 %80
    %v83 = vsel %vm30, %v81, 0.0
    %84 = vadd.xlane.f32.xlu0 %v83
    %v85 = vpop.xlane.xlu0 %84
    %v86 = vlog2.pop %v85
    %v87 = vmul.f32 %v86, 0.6931472
    %v88 = vadd.f32 %v75, %v87
    %90 = vrot.lane.b32.xlu0 %v29, 112
    %v91 = vpop.permute.xlu0 %90
    %v93 = vmul.f32 %v28, %v91
    %v94 = vsel %vm30, %v93, 0.0
    %95 = vadd.xlane.f32.xlu0 %v94
    %v96 = vpop.xlane.xlu0 %95
    %v97 = vsub.f32 %v88, %v96
    %v98 = vmul.f32 %v97, %v19
    %v99 = vrot.slane %v98, 4
    %v100 = vadd.f32 %v98, %v99
    %v101 = vrot.slane %v100, 2
    %v102 = vadd.f32 %v100, %v101
    %v103 = vrot.slane %v102, 1
    %v104 = vadd.f32 %v102, %v103
    %v105 = vsel %vm30, %v71, -inf
    %106 = vmax.xlane.f32.xlu0 %v105
    %v107 = vpop.xlane.xlu0 %106
    %v108 = vsub.f32 %v71, %v107
    %v109 = vmul.f32 %v108, 1.442695
    %v110 = vpow.pop %v109
    %v111 = vsel %vm30, %v110, 0.0
    %112 = vadd.xlane.f32.xlu0 %v111
    %v113 = vpop.xlane.xlu0 %112
    %v114 = vrcp.pop %v113
    %v115 = vmul.f32 1.0, %v114
    %v116 = vmul.f32 %v110, %v115
    %v117 = vsel %vm30, %v116, 0.0
    %118 = vadd.xlane.f32.xlu0 %v117
    %v119 = vpop.xlane.xlu0 %118
    %v120 = vsub.f32 1.0, %v119
    %v121 = vmul.f32 %v120, %v19
    %v122 = vrot.slane %v121, 4
    %v123 = vadd.f32 %v121, %v122
    %v124 = vrot.slane %v123, 2
    %v125 = vadd.f32 %v123, %v124
    %v126 = vrot.slane %v125, 1
    %v127 = vadd.f32 %v125, %v126
    %v128 = vmul.f32 %v29, 0.6666667
    %v129 = vmul.f32 %v71, 0.3333333
    %131 = vrot.lane.b32.xlu0 %v129, 16
    %v132 = vpop.permute.xlu0 %131
    %v134 = vadd.f32 %v128, %v132
    %vm135 = vcmask 392448
    %v136 = vsel %vm135, %v29, -inf
    %137 = vmax.xlane.f32.xlu0 %v136
    %v138 = vpop.xlane.xlu0 %137
    %v139 = vsub.f32 %v29, %v138
    %v140 = vmul.f32 %v139, 1.442695
    %v141 = vpow.pop %v140
    %143 = vrot.lane.b32.xlu0 %v141, 96
    %v144 = vpop.permute.xlu0 %143
    %v146 = vsel %vm30, %v144, 0.0
    %147 = vadd.xlane.f32.xlu0 %v146
    %v148 = vpop.xlane.xlu0 %147
    %v149 = vlog2.pop %v148
    %v150 = vmul.f32 %v149, 0.6931472
    %v151 = vadd.f32 %v138, %v150
    %152 = vrot.lane.b32.xlu0 %v29, 96
    %v153 = vpop.permute.xlu0 %152
    %v155 = vmul.f32 %v28, %v153
    %v156 = vsel %vm30, %v155, 0.0
    %157 = vadd.xlane.f32.xlu0 %v156
    %v158 = vpop.xlane.xlu0 %157
    %v159 = vsub.f32 %v151, %v158
    %v160 = vmul.f32 %v159, %v19
    %v161 = vrot.slane %v160, 4
    %v162 = vadd.f32 %v160, %v161
    %v163 = vrot.slane %v162, 2
    %v164 = vadd.f32 %v162, %v163
    %v165 = vrot.slane %v164, 1
    %v166 = vadd.f32 %v164, %v165
    %v167 = vsel %vm72, %v134, -inf
    %168 = vmax.xlane.f32.xlu0 %v167
    %v169 = vpop.xlane.xlu0 %168
    %v170 = vsub.f32 %v134, %v169
    %v171 = vmul.f32 %v170, 1.442695
    %v172 = vpow.pop %v171
    %174 = vrot.lane.b32.xlu0 %v172, 112
    %v175 = vpop.permute.xlu0 %174
    %v177 = vsel %vm30, %v175, 0.0
    %178 = vadd.xlane.f32.xlu0 %v177
    %v179 = vpop.xlane.xlu0 %178
    %v180 = vrcp.pop %v179
    %v181 = vmul.f32 1.0, %v180
    %v182 = vmul.f32 %v172, %v181
    %184 = vrot.lane.b32.xlu0 %v182, 112
    %v185 = vpop.permute.xlu0 %184
    %v187 = vsel %vm30, %v185, 0.0
    %188 = vadd.xlane.f32.xlu0 %v187
    %v189 = vpop.xlane.xlu0 %188
    %v190 = vsub.f32 1.0, %v189
    %v191 = vmul.f32 %v190, %v19
    %v192 = vrot.slane %v191, 4
    %v193 = vadd.f32 %v191, %v192
    %v194 = vrot.slane %v193, 2
    %v195 = vadd.f32 %v193, %v194
    %v196 = vrot.slane %v195, 1
    %v197 = vadd.f32 %v195, %v196
    %v198 = vmul.f32 %v29, 0.5
    %v199 = vmul.f32 %v134, 0.5
    %201 = vrot.lane.b32.xlu0 %v199, 16
    %v202 = vpop.permute.xlu0 %201
    %v204 = vadd.f32 %v198, %v202
    %vm205 = vcmask 523648
    %v206 = vsel %vm205, %v29, -inf
    %207 = vmax.xlane.f32.xlu0 %v206
    %v208 = vpop.xlane.xlu0 %207
    %v209 = vsub.f32 %v29, %v208
    %v210 = vmul.f32 %v209, 1.442695
    %v211 = vpow.pop %v210
    %213 = vrot.lane.b32.xlu0 %v211, 80
    %v214 = vpop.permute.xlu0 %213
    %v216 = vsel %vm30, %v214, 0.0
    %217 = vadd.xlane.f32.xlu0 %v216
    %v218 = vpop.xlane.xlu0 %217
    %v219 = vlog2.pop %v218
    %v220 = vmul.f32 %v219, 0.6931472
    %v221 = vadd.f32 %v208, %v220
    %222 = vrot.lane.b32.xlu0 %v29, 80
    %v223 = vpop.permute.xlu0 %222
    %v225 = vmul.f32 %v28, %v223
    %v226 = vsel %vm30, %v225, 0.0
    %227 = vadd.xlane.f32.xlu0 %v226
    %v228 = vpop.xlane.xlu0 %227
    %v229 = vsub.f32 %v221, %v228
    %v230 = vmul.f32 %v229, %v19
    %v231 = vrot.slane %v230, 4
    %v232 = vadd.f32 %v230, %v231
    %v233 = vrot.slane %v232, 2
    %v234 = vadd.f32 %v232, %v233
    %v235 = vrot.slane %v234, 1
    %v236 = vadd.f32 %v234, %v235
    %v237 = vsel %vm135, %v204, -inf
    %238 = vmax.xlane.f32.xlu0 %v237
    %v239 = vpop.xlane.xlu0 %238
    %v240 = vsub.f32 %v204, %v239
    %v241 = vmul.f32 %v240, 1.442695
    %v242 = vpow.pop %v241
    %244 = vrot.lane.b32.xlu0 %v242, 96
    %v245 = vpop.permute.xlu0 %244
    %v247 = vsel %vm30, %v245, 0.0
    %248 = vadd.xlane.f32.xlu0 %v247
    %v249 = vpop.xlane.xlu0 %248
    %v250 = vrcp.pop %v249
    %v251 = vmul.f32 1.0, %v250
    %v252 = vmul.f32 %v242, %v251
    %254 = vrot.lane.b32.xlu0 %v252, 96
    %v255 = vpop.permute.xlu0 %254
    %v257 = vsel %vm30, %v255, 0.0
    %258 = vadd.xlane.f32.xlu0 %v257
    %v259 = vpop.xlane.xlu0 %258
    %v260 = vsub.f32 1.0, %v259
    %v261 = vmul.f32 %v260, %v19
    %v262 = vrot.slane %v261, 4
    %v263 = vadd.f32 %v261, %v262
    %v264 = vrot.slane %v263, 2
    %v265 = vadd.f32 %v263, %v264
    %v266 = vrot.slane %v265, 1
    %v267 = vadd.f32 %v265, %v266
    %vm268 = vcmp.eq.s32.totalorder %v14, 0
    %vm269 = vcmp.eq.s32.totalorder %v22, 0
    %vm270 = vmand %vm268, %vm269
    %v271 = vsel %vm270, %v54, 0.0
    %v272 = vadd.f32 %v271, 0.0
    %vm273 = vcmp.eq.s32.totalorder %v14, 1
    %vm274 = vmand %vm273, %vm269
    %v275 = vsel %vm274, %v70, 0.0
    %v276 = vadd.f32 %v272, %v275
    %vm277 = vcmp.eq.s32.totalorder %v22, 1
    %vm278 = vmand %vm268, %vm277
    %v279 = vsel %vm278, %v104, 0.0
    %v280 = vadd.f32 %v276, %v279
    %vm281 = vmand %vm273, %vm277
    %v282 = vsel %vm281, %v127, 0.0
    %v283 = vadd.f32 %v280, %v282
    %vm284 = vcmp.eq.s32.totalorder %v22, 2
    %vm285 = vmand %vm268, %vm284
    %v286 = vsel %vm285, %v166, 0.0
    %v287 = vadd.f32 %v283, %v286
    %vm288 = vmand %vm273, %vm284
    %v289 = vsel %vm288, %v197, 0.0
    %v290 = vadd.f32 %v287, %v289
    %vm291 = vcmp.eq.s32.totalorder %v22, 3
    %vm292 = vmand %vm268, %vm291
    %v293 = vsel %vm292, %v236, 0.0
    %v294 = vadd.f32 %v290, %v293
    %vm295 = vmand %vm273, %vm291
    %v296 = vsel %vm295, %v267, 0.0
    %v297 = vadd.f32 %v294, %v296
    %298 = vst [vmem:[#allocation2] sm:$0xff] %v297
    // Predicated region
    $region10: #{tpu_custom_call.1} parent=1 // pred_check
      _
    $region11: #{tpu_custom_call.1} parent=1 // pred_check_branch
      %300 = sbr.rel (0) target = $region13
    $region12: #{tpu_custom_call.1} parent=1 // pred_region
      %s302 = ssub.s32 128, 128
      %303 = vsyncadd [#allocation3], %s302
      %s305 = sshll.u32 [#allocation2], 4
      %s306 = int_to_ptr.vmem [resolvable:$true] %s305
      %308 = dma.vmem_to_hbm [thread:$0]  %s306, 128, %s2, [#allocation3]
    $region13: #{tpu_custom_call.1} parent=1 // pred_fallthru
      _
    // Predicated region
    $region14: #{tpu_custom_call.1} parent=1 // pred_check
      _
    $region15: #{tpu_custom_call.1} parent=1 // pred_check_branch
      %310 = sbr.rel (0) target = $region17
    $region16: #{tpu_custom_call.1} parent=1 // pred_region
      %311 = dma.done [#allocation3], 128
    $region17: #{tpu_custom_call.1} parent=1 // pred_fallthru
      _
    %312 = vsyncpa [#allocation3], 1

</llo_original>
